<compile_context>
chip_gen: v6e
topology: v6e:2x2x1
jax: 0.10.0
libtpu: 0.0.40
codegen_flags: <defaults>
</compile_context>

<pallas_src>
import functools

import jax
import jax.numpy as jnp
from jax.experimental import pallas as pl
from jax.experimental.pallas import tpu as pltpu


def downsampling_kernel(x_ref, w_ref, b_ref, o_ref, *, cin, k, h_out, w_out,
                        negative_slope):
    # x_ref: VMEM (4*Cin, N, Hh, Wh)  polyphase-split, padded input (native dtype)
    #        plane (ph*2+pw)*Cin + ci holds x_pad[:, ci, ph::2, pw::2]
    # w_ref: SMEM (Cout*Cin*K*K,)     flattened Conv2d weight (OIHW order), f32
    # b_ref: SMEM (Cout,)             conv bias, f32
    # o_ref: VMEM (N, Ho, Wo)         one output channel (channel dim squeezed
    #                                 by the BlockSpec; grid axis = Cout)
    co = pl.program_id(0)
    n = o_ref.shape[0]
    w_base = co * (cin * k * k)

    acc = jnp.zeros((n, h_out, w_out), jnp.float32)
    for ci in range(cin):
        for ph in range(2):
            for pw in range(2):
                # One contiguous polyphase plane, loaded once and reused for all
                # taps of this parity (slab hoisting; no stride-2 gathers).
                plane = x_ref[(ph * 2 + pw) * cin + ci].astype(jnp.float32)
                for kh in range(ph, k, 2):
                    oh = kh // 2
                    for kw in range(pw, k, 2):
                        ow = kw // 2
                        wv = w_ref[w_base + (ci * k + kh) * k + kw]
                        acc = acc + wv * plane[:, oh:oh + h_out, ow:ow + w_out]

    # Fused epilogue: bias + LeakyReLU(negative_slope), stored in output dtype.
    y = acc + b_ref[co]
    o_ref[...] = jnp.where(y >= 0.0, y, negative_slope * y).astype(o_ref.dtype)


def downsampling_pallas(x, weight, bias, *, stride=2, padding=1,
                        negative_slope=0.2):
    """x: (N, Cin, H, W); weight: (Cout, Cin, K, K) (PyTorch Conv2d layout); bias: (Cout,)."""
    assert stride == 2, "polyphase split below is written for stride 2"
    n, cin, h, w = x.shape
    cout, _, k, _ = weight.shape
    h_out = (h + 2 * padding - k) // stride + 1
    w_out = (w + 2 * padding - k) // stride + 1

    # ---- wrapper-side layout glue only (no compute, no dtype upcast of x) ----
    x_pad = jnp.pad(x, ((0, 0), (0, 0), (padding, padding), (padding, padding)))
    hp, wp = h + 2 * padding, w + 2 * padding
    hpe, wpe = hp + (hp % 2), wp + (wp % 2)        # make both parities same size
    x_pad = jnp.pad(x_pad, ((0, 0), (0, 0), (0, hpe - hp), (0, wpe - wp)))
    hh, wh = hpe // 2, wpe // 2
    # Polyphase split: x_poly[(ph*2+pw)*cin+ci, n, i, j] = x_pad[n, ci, 2i+ph, 2j+pw]
    x_poly = x_pad.reshape(n, cin, hh, 2, wh, 2)
    x_poly = jnp.transpose(x_poly, (3, 5, 1, 0, 2, 4)).reshape(4 * cin, n, hh, wh)

    w_flat = weight.reshape(-1).astype(jnp.float32)     # (Cout*Cin*K*K,), OIHW order
    b_vec = bias.astype(jnp.float32)

    kernel = functools.partial(downsampling_kernel, cin=cin, k=k,
                               h_out=h_out, w_out=w_out,
                               negative_slope=negative_slope)

    return pl.pallas_call(
        kernel,
        out_shape=jax.ShapeDtypeStruct((n, cout, h_out, w_out), x.dtype),
        grid=(cout,),
        in_specs=[
            # Input block is identical for every grid step -> stays resident in
            # VMEM (no re-DMA across the Cout loop).
            pl.BlockSpec((4 * cin, n, hh, wh), lambda c: (0, 0, 0, 0)),
            pl.BlockSpec(memory_space=pltpu.MemorySpace.SMEM),   # weights (scalars)
            pl.BlockSpec(memory_space=pltpu.MemorySpace.SMEM),   # bias
        ],
        # One output channel per grid step; channel dim squeezed in-kernel.
        out_specs=pl.BlockSpec((n, None, h_out, w_out), lambda c: (0, c, 0, 0)),
        compiler_params=pltpu.CompilerParams(
            dimension_semantics=("parallel",),        # v7x: split Cout across TCs
            vmem_limit_bytes=32 * 1024 * 1024,        # explicit budget (v7x-safe)
        ),
    )(x_poly, w_flat, b_vec)


def reference_forward(x, weight, bias, *, stride=2, padding=1, negative_slope=0.2):
    """Pure-JAX reference of the PyTorch Downsampling forward pass."""
    y = jax.lax.conv_general_dilated(
        x.astype(jnp.float32), weight.astype(jnp.float32),
        window_strides=(stride, stride),
        padding=((padding, padding), (padding, padding)),
        dimension_numbers=("NCHW", "OIHW", "NCHW"),
        precision=jax.lax.Precision.HIGHEST)
    y = y + bias.reshape(1, -1, 1, 1).astype(jnp.float32)
    return jnp.where(y >= 0.0, y, negative_slope * y)


if __name__ == "__main__":
    key = jax.random.PRNGKey(0)
    k_x, k_w, k_b = jax.random.split(key, 3)

    N, C_IN, H, W = 2, 4, 16, 16
    K = 3
    C_OUT = 2 * C_IN   # Downsampling doubles the channel count

    x = jax.random.normal(k_x, (N, C_IN, H, W), jnp.float32)
    # Conv2d weight shape: (out_channels, in_channels, kH, kW), bias=True default.
    weight = jax.random.normal(k_w, (C_OUT, C_IN, K, K), jnp.float32) * 0.1
    bias = jax.random.normal(k_b, (C_OUT,), jnp.float32) * 0.1

    out = downsampling_pallas(x, weight, bias)
    out = jax.block_until_ready(out)

    ref = reference_forward(x, weight, bias)
    assert out.shape == (N, C_OUT, H // 2, W // 2), out.shape
    assert jnp.allclose(out, ref, atol=1e-3, rtol=1e-3), float(
        jnp.max(jnp.abs(out - ref)))

    print("KERNEL_OK")
</pallas_src>

<mosaic_0001>
module attributes {stable_mosaic.version = 11 : i64} {
  func.func @downsampling_kernel(%arg0: i32, %arg1: memref<16x2x9x9xf32, #tpu.memory_space<vmem>>, %arg2: memref<288xf32, #tpu.memory_space<smem>>, %arg3: memref<8xf32, #tpu.memory_space<smem>>, %arg4: memref<2x1x8x8xf32, #tpu.memory_space<vmem>>) attributes {dimension_semantics = [#tpu.dimension_semantics<parallel>], iteration_bounds = array<i64: 8>, scalar_prefetch = 0 : i64, scratch_operands = 0 : i64, tpu.core_type = #tpu.core_type<tc>, window_params = [{pipeline_mode = #tpu.pipeline_mode<synchronous>, transform_indices = @transform_0, window_bounds = array<i64: 16, 2, 9, 9>}, {transform_indices = @transform_1, window_bounds = array<i64: 288>}, {transform_indices = @transform_2, window_bounds = array<i64: 8>}, {transform_indices = @transform_3, window_bounds = array<i64: 2, 1, 8, 8>}]} {
    %c36_i32 = arith.constant 36 : i32
    %0 = arith.muli %arg0, %c36_i32 : i32
    %cst = arith.constant 0.000000e+00 : f32
    %1 = vector.broadcast %cst : f32 to vector<2x8x8xf32>
    %c0 = arith.constant 0 : index
    %c0_0 = arith.constant 0 : index
    %c0_1 = arith.constant 0 : index
    %c0_2 = arith.constant 0 : index
    %2 = vector.load %arg1[%c0, %c0_0, %c0_1, %c0_2] : memref<16x2x9x9xf32, #tpu.memory_space<vmem>>, vector<1x2x9x9xf32>
    %3 = vector.shape_cast %2 : vector<1x2x9x9xf32> to vector<2x9x9xf32>
    %c0_i32 = arith.constant 0 : i32
    %4 = arith.addi %0, %c0_i32 : i32
    %c0_i32_3 = arith.constant 0 : i32
    %5 = arith.addi %4, %c0_i32_3 : i32
    %6 = arith.index_cast %5 : i32 to index
    %7 = memref.load %arg2[%6] : memref<288xf32, #tpu.memory_space<smem>>
    %8 = vector.extract_strided_slice %3 {offsets = [0, 0, 0], sizes = [2, 8, 8], strides = [1, 1, 1]} : vector<2x9x9xf32> to vector<2x8x8xf32>
    %9 = vector.broadcast %7 : f32 to vector<2x8x8xf32>
    %10 = arith.mulf %9, %8 : vector<2x8x8xf32>
    %11 = arith.addf %1, %10 : vector<2x8x8xf32>
    %c0_i32_4 = arith.constant 0 : i32
    %12 = arith.addi %0, %c0_i32_4 : i32
    %c2_i32 = arith.constant 2 : i32
    %13 = arith.addi %12, %c2_i32 : i32
    %14 = arith.index_cast %13 : i32 to index
    %15 = memref.load %arg2[%14] : memref<288xf32, #tpu.memory_space<smem>>
    %16 = vector.extract_strided_slice %3 {offsets = [0, 0, 1], sizes = [2, 8, 8], strides = [1, 1, 1]} : vector<2x9x9xf32> to vector<2x8x8xf32>
    %17 = vector.broadcast %15 : f32 to vector<2x8x8xf32>
    %18 = arith.mulf %17, %16 : vector<2x8x8xf32>
    %19 = arith.addf %11, %18 : vector<2x8x8xf32>
    %c6_i32 = arith.constant 6 : i32
    %20 = arith.addi %0, %c6_i32 : i32
    %c0_i32_5 = arith.constant 0 : i32
    %21 = arith.addi %20, %c0_i32_5 : i32
    %22 = arith.index_cast %21 : i32 to index
    %23 = memref.load %arg2[%22] : memref<288xf32, #tpu.memory_space<smem>>
    %24 = vector.extract_strided_slice %3 {offsets = [0, 1, 0], sizes = [2, 8, 8], strides = [1, 1, 1]} : vector<2x9x9xf32> to vector<2x8x8xf32>
    %25 = vector.broadcast %23 : f32 to vector<2x8x8xf32>
    %26 = arith.mulf %25, %24 : vector<2x8x8xf32>
    %27 = arith.addf %19, %26 : vector<2x8x8xf32>
    %c6_i32_6 = arith.constant 6 : i32
    %28 = arith.addi %0, %c6_i32_6 : i32
    %c2_i32_7 = arith.constant 2 : i32
    %29 = arith.addi %28, %c2_i32_7 : i32
    %30 = arith.index_cast %29 : i32 to index
    %31 = memref.load %arg2[%30] : memref<288xf32, #tpu.memory_space<smem>>
    %32 = vector.extract_strided_slice %3 {offsets = [0, 1, 1], sizes = [2, 8, 8], strides = [1, 1, 1]} : vector<2x9x9xf32> to vector<2x8x8xf32>
    %33 = vector.broadcast %31 : f32 to vector<2x8x8xf32>
    %34 = arith.mulf %33, %32 : vector<2x8x8xf32>
    %35 = arith.addf %27, %34 : vector<2x8x8xf32>
    %c4 = arith.constant 4 : index
    %c0_8 = arith.constant 0 : index
    %c0_9 = arith.constant 0 : index
    %c0_10 = arith.constant 0 : index
    %36 = vector.load %arg1[%c4, %c0_8, %c0_9, %c0_10] : memref<16x2x9x9xf32, #tpu.memory_space<vmem>>, vector<1x2x9x9xf32>
    %37 = vector.shape_cast %36 : vector<1x2x9x9xf32> to vector<2x9x9xf32>
    %c0_i32_11 = arith.constant 0 : i32
    %38 = arith.addi %0, %c0_i32_11 : i32
    %c1_i32 = arith.constant 1 : i32
    %39 = arith.addi %38, %c1_i32 : i32
    %40 = arith.index_cast %39 : i32 to index
    %41 = memref.load %arg2[%40] : memref<288xf32, #tpu.memory_space<smem>>
    %42 = vector.extract_strided_slice %37 {offsets = [0, 0, 0], sizes = [2, 8, 8], strides = [1, 1, 1]} : vector<2x9x9xf32> to vector<2x8x8xf32>
    %43 = vector.broadcast %41 : f32 to vector<2x8x8xf32>
    %44 = arith.mulf %43, %42 : vector<2x8x8xf32>
    %45 = arith.addf %35, %44 : vector<2x8x8xf32>
    %c6_i32_12 = arith.constant 6 : i32
    %46 = arith.addi %0, %c6_i32_12 : i32
    %c1_i32_13 = arith.constant 1 : i32
    %47 = arith.addi %46, %c1_i32_13 : i32
    %48 = arith.index_cast %47 : i32 to index
    %49 = memref.load %arg2[%48] : memref<288xf32, #tpu.memory_space<smem>>
    %50 = vector.extract_strided_slice %37 {offsets = [0, 1, 0], sizes = [2, 8, 8], strides = [1, 1, 1]} : vector<2x9x9xf32> to vector<2x8x8xf32>
    %51 = vector.broadcast %49 : f32 to vector<2x8x8xf32>
    %52 = arith.mulf %51, %50 : vector<2x8x8xf32>
    %53 = arith.addf %45, %52 : vector<2x8x8xf32>
    %c8 = arith.constant 8 : index
    %c0_14 = arith.constant 0 : index
    %c0_15 = arith.constant 0 : index
    %c0_16 = arith.constant 0 : index
    %54 = vector.load %arg1[%c8, %c0_14, %c0_15, %c0_16] : memref<16x2x9x9xf32, #tpu.memory_space<vmem>>, vector<1x2x9x9xf32>
    %55 = vector.shape_cast %54 : vector<1x2x9x9xf32> to vector<2x9x9xf32>
    %c3_i32 = arith.constant 3 : i32
    %56 = arith.addi %0, %c3_i32 : i32
    %c0_i32_17 = arith.constant 0 : i32
    %57 = arith.addi %56, %c0_i32_17 : i32
    %58 = arith.index_cast %57 : i32 to index
    %59 = memref.load %arg2[%58] : memref<288xf32, #tpu.memory_space<smem>>
    %60 = vector.extract_strided_slice %55 {offsets = [0, 0, 0], sizes = [2, 8, 8], strides = [1, 1, 1]} : vector<2x9x9xf32> to vector<2x8x8xf32>
    %61 = vector.broadcast %59 : f32 to vector<2x8x8xf32>
    %62 = arith.mulf %61, %60 : vector<2x8x8xf32>
    %63 = arith.addf %53, %62 : vector<2x8x8xf32>
    %c3_i32_18 = arith.constant 3 : i32
    %64 = arith.addi %0, %c3_i32_18 : i32
    %c2_i32_19 = arith.constant 2 : i32
    %65 = arith.addi %64, %c2_i32_19 : i32
    %66 = arith.index_cast %65 : i32 to index
    %67 = memref.load %arg2[%66] : memref<288xf32, #tpu.memory_space<smem>>
    %68 = vector.extract_strided_slice %55 {offsets = [0, 0, 1], sizes = [2, 8, 8], strides = [1, 1, 1]} : vector<2x9x9xf32> to vector<2x8x8xf32>
    %69 = vector.broadcast %67 : f32 to vector<2x8x8xf32>
    %70 = arith.mulf %69, %68 : vector<2x8x8xf32>
    %71 = arith.addf %63, %70 : vector<2x8x8xf32>
    %c12 = arith.constant 12 : index
    %c0_20 = arith.constant 0 : index
    %c0_21 = arith.constant 0 : index
    %c0_22 = arith.constant 0 : index
    %72 = vector.load %arg1[%c12, %c0_20, %c0_21, %c0_22] : memref<16x2x9x9xf32, #tpu.memory_space<vmem>>, vector<1x2x9x9xf32>
    %73 = vector.shape_cast %72 : vector<1x2x9x9xf32> to vector<2x9x9xf32>
    %c3_i32_23 = arith.constant 3 : i32
    %74 = arith.addi %0, %c3_i32_23 : i32
    %c1_i32_24 = arith.constant 1 : i32
    %75 = arith.addi %74, %c1_i32_24 : i32
    %76 = arith.index_cast %75 : i32 to index
    %77 = memref.load %arg2[%76] : memref<288xf32, #tpu.memory_space<smem>>
    %78 = vector.extract_strided_slice %73 {offsets = [0, 0, 0], sizes = [2, 8, 8], strides = [1, 1, 1]} : vector<2x9x9xf32> to vector<2x8x8xf32>
    %79 = vector.broadcast %77 : f32 to vector<2x8x8xf32>
    %80 = arith.mulf %79, %78 : vector<2x8x8xf32>
    %81 = arith.addf %71, %80 : vector<2x8x8xf32>
    %c1 = arith.constant 1 : index
    %c0_25 = arith.constant 0 : index
    %c0_26 = arith.constant 0 : index
    %c0_27 = arith.constant 0 : index
    %82 = vector.load %arg1[%c1, %c0_25, %c0_26, %c0_27] : memref<16x2x9x9xf32, #tpu.memory_space<vmem>>, vector<1x2x9x9xf32>
    %83 = vector.shape_cast %82 : vector<1x2x9x9xf32> to vector<2x9x9xf32>
    %c9_i32 = arith.constant 9 : i32
    %84 = arith.addi %0, %c9_i32 : i32
    %c0_i32_28 = arith.constant 0 : i32
    %85 = arith.addi %84, %c0_i32_28 : i32
    %86 = arith.index_cast %85 : i32 to index
    %87 = memref.load %arg2[%86] : memref<288xf32, #tpu.memory_space<smem>>
    %88 = vector.extract_strided_slice %83 {offsets = [0, 0, 0], sizes = [2, 8, 8], strides = [1, 1, 1]} : vector<2x9x9xf32> to vector<2x8x8xf32>
    %89 = vector.broadcast %87 : f32 to vector<2x8x8xf32>
    %90 = arith.mulf %89, %88 : vector<2x8x8xf32>
    %91 = arith.addf %81, %90 : vector<2x8x8xf32>
    %c9_i32_29 = arith.constant 9 : i32
    %92 = arith.addi %0, %c9_i32_29 : i32
    %c2_i32_30 = arith.constant 2 : i32
    %93 = arith.addi %92, %c2_i32_30 : i32
    %94 = arith.index_cast %93 : i32 to index
    %95 = memref.load %arg2[%94] : memref<288xf32, #tpu.memory_space<smem>>
    %96 = vector.extract_strided_slice %83 {offsets = [0, 0, 1], sizes = [2, 8, 8], strides = [1, 1, 1]} : vector<2x9x9xf32> to vector<2x8x8xf32>
    %97 = vector.broadcast %95 : f32 to vector<2x8x8xf32>
    %98 = arith.mulf %97, %96 : vector<2x8x8xf32>
    %99 = arith.addf %91, %98 : vector<2x8x8xf32>
    %c15_i32 = arith.constant 15 : i32
    %100 = arith.addi %0, %c15_i32 : i32
    %c0_i32_31 = arith.constant 0 : i32
    %101 = arith.addi %100, %c0_i32_31 : i32
    %102 = arith.index_cast %101 : i32 to index
    %103 = memref.load %arg2[%102] : memref<288xf32, #tpu.memory_space<smem>>
    %104 = vector.extract_strided_slice %83 {offsets = [0, 1, 0], sizes = [2, 8, 8], strides = [1, 1, 1]} : vector<2x9x9xf32> to vector<2x8x8xf32>
    %105 = vector.broadcast %103 : f32 to vector<2x8x8xf32>
    %106 = arith.mulf %105, %104 : vector<2x8x8xf32>
    %107 = arith.addf %99, %106 : vector<2x8x8xf32>
    %c15_i32_32 = arith.constant 15 : i32
    %108 = arith.addi %0, %c15_i32_32 : i32
    %c2_i32_33 = arith.constant 2 : i32
    %109 = arith.addi %108, %c2_i32_33 : i32
    %110 = arith.index_cast %109 : i32 to index
    %111 = memref.load %arg2[%110] : memref<288xf32, #tpu.memory_space<smem>>
    %112 = vector.extract_strided_slice %83 {offsets = [0, 1, 1], sizes = [2, 8, 8], strides = [1, 1, 1]} : vector<2x9x9xf32> to vector<2x8x8xf32>
    %113 = vector.broadcast %111 : f32 to vector<2x8x8xf32>
    %114 = arith.mulf %113, %112 : vector<2x8x8xf32>
    %115 = arith.addf %107, %114 : vector<2x8x8xf32>
    %c5 = arith.constant 5 : index
    %c0_34 = arith.constant 0 : index
    %c0_35 = arith.constant 0 : index
    %c0_36 = arith.constant 0 : index
    %116 = vector.load %arg1[%c5, %c0_34, %c0_35, %c0_36] : memref<16x2x9x9xf32, #tpu.memory_space<vmem>>, vector<1x2x9x9xf32>
    %117 = vector.shape_cast %116 : vector<1x2x9x9xf32> to vector<2x9x9xf32>
    %c9_i32_37 = arith.constant 9 : i32
    %118 = arith.addi %0, %c9_i32_37 : i32
    %c1_i32_38 = arith.constant 1 : i32
    %119 = arith.addi %118, %c1_i32_38 : i32
    %120 = arith.index_cast %119 : i32 to index
    %121 = memref.load %arg2[%120] : memref<288xf32, #tpu.memory_space<smem>>
    %122 = vector.extract_strided_slice %117 {offsets = [0, 0, 0], sizes = [2, 8, 8], strides = [1, 1, 1]} : vector<2x9x9xf32> to vector<2x8x8xf32>
    %123 = vector.broadcast %121 : f32 to vector<2x8x8xf32>
    %124 = arith.mulf %123, %122 : vector<2x8x8xf32>
    %125 = arith.addf %115, %124 : vector<2x8x8xf32>
    %c15_i32_39 = arith.constant 15 : i32
    %126 = arith.addi %0, %c15_i32_39 : i32
    %c1_i32_40 = arith.constant 1 : i32
    %127 = arith.addi %126, %c1_i32_40 : i32
    %128 = arith.index_cast %127 : i32 to index
    %129 = memref.load %arg2[%128] : memref<288xf32, #tpu.memory_space<smem>>
    %130 = vector.extract_strided_slice %117 {offsets = [0, 1, 0], sizes = [2, 8, 8], strides = [1, 1, 1]} : vector<2x9x9xf32> to vector<2x8x8xf32>
    %131 = vector.broadcast %129 : f32 to vector<2x8x8xf32>
    %132 = arith.mulf %131, %130 : vector<2x8x8xf32>
    %133 = arith.addf %125, %132 : vector<2x8x8xf32>
    %c9 = arith.constant 9 : index
    %c0_41 = arith.constant 0 : index
    %c0_42 = arith.constant 0 : index
    %c0_43 = arith.constant 0 : index
    %134 = vector.load %arg1[%c9, %c0_41, %c0_42, %c0_43] : memref<16x2x9x9xf32, #tpu.memory_space<vmem>>, vector<1x2x9x9xf32>
    %135 = vector.shape_cast %134 : vector<1x2x9x9xf32> to vector<2x9x9xf32>
    %c12_i32 = arith.constant 12 : i32
    %136 = arith.addi %0, %c12_i32 : i32
    %c0_i32_44 = arith.constant 0 : i32
    %137 = arith.addi %136, %c0_i32_44 : i32
    %138 = arith.index_cast %137 : i32 to index
    %139 = memref.load %arg2[%138] : memref<288xf32, #tpu.memory_space<smem>>
    %140 = vector.extract_strided_slice %135 {offsets = [0, 0, 0], sizes = [2, 8, 8], strides = [1, 1, 1]} : vector<2x9x9xf32> to vector<2x8x8xf32>
    %141 = vector.broadcast %139 : f32 to vector<2x8x8xf32>
    %142 = arith.mulf %141, %140 : vector<2x8x8xf32>
    %143 = arith.addf %133, %142 : vector<2x8x8xf32>
    %c12_i32_45 = arith.constant 12 : i32
    %144 = arith.addi %0, %c12_i32_45 : i32
    %c2_i32_46 = arith.constant 2 : i32
    %145 = arith.addi %144, %c2_i32_46 : i32
    %146 = arith.index_cast %145 : i32 to index
    %147 = memref.load %arg2[%146] : memref<288xf32, #tpu.memory_space<smem>>
    %148 = vector.extract_strided_slice %135 {offsets = [0, 0, 1], sizes = [2, 8, 8], strides = [1, 1, 1]} : vector<2x9x9xf32> to vector<2x8x8xf32>
    %149 = vector.broadcast %147 : f32 to vector<2x8x8xf32>
    %150 = arith.mulf %149, %148 : vector<2x8x8xf32>
    %151 = arith.addf %143, %150 : vector<2x8x8xf32>
    %c13 = arith.constant 13 : index
    %c0_47 = arith.constant 0 : index
    %c0_48 = arith.constant 0 : index
    %c0_49 = arith.constant 0 : index
    %152 = vector.load %arg1[%c13, %c0_47, %c0_48, %c0_49] : memref<16x2x9x9xf32, #tpu.memory_space<vmem>>, vector<1x2x9x9xf32>
    %153 = vector.shape_cast %152 : vector<1x2x9x9xf32> to vector<2x9x9xf32>
    %c12_i32_50 = arith.constant 12 : i32
    %154 = arith.addi %0, %c12_i32_50 : i32
    %c1_i32_51 = arith.constant 1 : i32
    %155 = arith.addi %154, %c1_i32_51 : i32
    %156 = arith.index_cast %155 : i32 to index
    %157 = memref.load %arg2[%156] : memref<288xf32, #tpu.memory_space<smem>>
    %158 = vector.extract_strided_slice %153 {offsets = [0, 0, 0], sizes = [2, 8, 8], strides = [1, 1, 1]} : vector<2x9x9xf32> to vector<2x8x8xf32>
    %159 = vector.broadcast %157 : f32 to vector<2x8x8xf32>
    %160 = arith.mulf %159, %158 : vector<2x8x8xf32>
    %161 = arith.addf %151, %160 : vector<2x8x8xf32>
    %c2 = arith.constant 2 : index
    %c0_52 = arith.constant 0 : index
    %c0_53 = arith.constant 0 : index
    %c0_54 = arith.constant 0 : index
    %162 = vector.load %arg1[%c2, %c0_52, %c0_53, %c0_54] : memref<16x2x9x9xf32, #tpu.memory_space<vmem>>, vector<1x2x9x9xf32>
    %163 = vector.shape_cast %162 : vector<1x2x9x9xf32> to vector<2x9x9xf32>
    %c18_i32 = arith.constant 18 : i32
    %164 = arith.addi %0, %c18_i32 : i32
    %c0_i32_55 = arith.constant 0 : i32
    %165 = arith.addi %164, %c0_i32_55 : i32
    %166 = arith.index_cast %165 : i32 to index
    %167 = memref.load %arg2[%166] : memref<288xf32, #tpu.memory_space<smem>>
    %168 = vector.extract_strided_slice %163 {offsets = [0, 0, 0], sizes = [2, 8, 8], strides = [1, 1, 1]} : vector<2x9x9xf32> to vector<2x8x8xf32>
    %169 = vector.broadcast %167 : f32 to vector<2x8x8xf32>
    %170 = arith.mulf %169, %168 : vector<2x8x8xf32>
    %171 = arith.addf %161, %170 : vector<2x8x8xf32>
    %c18_i32_56 = arith.constant 18 : i32
    %172 = arith.addi %0, %c18_i32_56 : i32
    %c2_i32_57 = arith.constant 2 : i32
    %173 = arith.addi %172, %c2_i32_57 : i32
    %174 = arith.index_cast %173 : i32 to index
    %175 = memref.load %arg2[%174] : memref<288xf32, #tpu.memory_space<smem>>
    %176 = vector.extract_strided_slice %163 {offsets = [0, 0, 1], sizes = [2, 8, 8], strides = [1, 1, 1]} : vector<2x9x9xf32> to vector<2x8x8xf32>
    %177 = vector.broadcast %175 : f32 to vector<2x8x8xf32>
    %178 = arith.mulf %177, %176 : vector<2x8x8xf32>
    %179 = arith.addf %171, %178 : vector<2x8x8xf32>
    %c24_i32 = arith.constant 24 : i32
    %180 = arith.addi %0, %c24_i32 : i32
    %c0_i32_58 = arith.constant 0 : i32
    %181 = arith.addi %180, %c0_i32_58 : i32
    %182 = arith.index_cast %181 : i32 to index
    %183 = memref.load %arg2[%182] : memref<288xf32, #tpu.memory_space<smem>>
    %184 = vector.extract_strided_slice %163 {offsets = [0, 1, 0], sizes = [2, 8, 8], strides = [1, 1, 1]} : vector<2x9x9xf32> to vector<2x8x8xf32>
    %185 = vector.broadcast %183 : f32 to vector<2x8x8xf32>
    %186 = arith.mulf %185, %184 : vector<2x8x8xf32>
    %187 = arith.addf %179, %186 : vector<2x8x8xf32>
    %c24_i32_59 = arith.constant 24 : i32
    %188 = arith.addi %0, %c24_i32_59 : i32
    %c2_i32_60 = arith.constant 2 : i32
    %189 = arith.addi %188, %c2_i32_60 : i32
    %190 = arith.index_cast %189 : i32 to index
    %191 = memref.load %arg2[%190] : memref<288xf32, #tpu.memory_space<smem>>
    %192 = vector.extract_strided_slice %163 {offsets = [0, 1, 1], sizes = [2, 8, 8], strides = [1, 1, 1]} : vector<2x9x9xf32> to vector<2x8x8xf32>
    %193 = vector.broadcast %191 : f32 to vector<2x8x8xf32>
    %194 = arith.mulf %193, %192 : vector<2x8x8xf32>
    %195 = arith.addf %187, %194 : vector<2x8x8xf32>
    %c6 = arith.constant 6 : index
    %c0_61 = arith.constant 0 : index
    %c0_62 = arith.constant 0 : index
    %c0_63 = arith.constant 0 : index
    %196 = vector.load %arg1[%c6, %c0_61, %c0_62, %c0_63] : memref<16x2x9x9xf32, #tpu.memory_space<vmem>>, vector<1x2x9x9xf32>
    %197 = vector.shape_cast %196 : vector<1x2x9x9xf32> to vector<2x9x9xf32>
    %c18_i32_64 = arith.constant 18 : i32
    %198 = arith.addi %0, %c18_i32_64 : i32
    %c1_i32_65 = arith.constant 1 : i32
    %199 = arith.addi %198, %c1_i32_65 : i32
    %200 = arith.index_cast %199 : i32 to index
    %201 = memref.load %arg2[%200] : memref<288xf32, #tpu.memory_space<smem>>
    %202 = vector.extract_strided_slice %197 {offsets = [0, 0, 0], sizes = [2, 8, 8], strides = [1, 1, 1]} : vector<2x9x9xf32> to vector<2x8x8xf32>
    %203 = vector.broadcast %201 : f32 to vector<2x8x8xf32>
    %204 = arith.mulf %203, %202 : vector<2x8x8xf32>
    %205 = arith.addf %195, %204 : vector<2x8x8xf32>
    %c24_i32_66 = arith.constant 24 : i32
    %206 = arith.addi %0, %c24_i32_66 : i32
    %c1_i32_67 = arith.constant 1 : i32
    %207 = arith.addi %206, %c1_i32_67 : i32
    %208 = arith.index_cast %207 : i32 to index
    %209 = memref.load %arg2[%208] : memref<288xf32, #tpu.memory_space<smem>>
    %210 = vector.extract_strided_slice %197 {offsets = [0, 1, 0], sizes = [2, 8, 8], strides = [1, 1, 1]} : vector<2x9x9xf32> to vector<2x8x8xf32>
    %211 = vector.broadcast %209 : f32 to vector<2x8x8xf32>
    %212 = arith.mulf %211, %210 : vector<2x8x8xf32>
    %213 = arith.addf %205, %212 : vector<2x8x8xf32>
    %c10 = arith.constant 10 : index
    %c0_68 = arith.constant 0 : index
    %c0_69 = arith.constant 0 : index
    %c0_70 = arith.constant 0 : index
    %214 = vector.load %arg1[%c10, %c0_68, %c0_69, %c0_70] : memref<16x2x9x9xf32, #tpu.memory_space<vmem>>, vector<1x2x9x9xf32>
    %215 = vector.shape_cast %214 : vector<1x2x9x9xf32> to vector<2x9x9xf32>
    %c21_i32 = arith.constant 21 : i32
    %216 = arith.addi %0, %c21_i32 : i32
    %c0_i32_71 = arith.constant 0 : i32
    %217 = arith.addi %216, %c0_i32_71 : i32
    %218 = arith.index_cast %217 : i32 to index
    %219 = memref.load %arg2[%218] : memref<288xf32, #tpu.memory_space<smem>>
    %220 = vector.extract_strided_slice %215 {offsets = [0, 0, 0], sizes = [2, 8, 8], strides = [1, 1, 1]} : vector<2x9x9xf32> to vector<2x8x8xf32>
    %221 = vector.broadcast %219 : f32 to vector<2x8x8xf32>
    %222 = arith.mulf %221, %220 : vector<2x8x8xf32>
    %223 = arith.addf %213, %222 : vector<2x8x8xf32>
    %c21_i32_72 = arith.constant 21 : i32
    %224 = arith.addi %0, %c21_i32_72 : i32
    %c2_i32_73 = arith.constant 2 : i32
    %225 = arith.addi %224, %c2_i32_73 : i32
    %226 = arith.index_cast %225 : i32 to index
    %227 = memref.load %arg2[%226] : memref<288xf32, #tpu.memory_space<smem>>
    %228 = vector.extract_strided_slice %215 {offsets = [0, 0, 1], sizes = [2, 8, 8], strides = [1, 1, 1]} : vector<2x9x9xf32> to vector<2x8x8xf32>
    %229 = vector.broadcast %227 : f32 to vector<2x8x8xf32>
    %230 = arith.mulf %229, %228 : vector<2x8x8xf32>
    %231 = arith.addf %223, %230 : vector<2x8x8xf32>
    %c14 = arith.constant 14 : index
    %c0_74 = arith.constant 0 : index
    %c0_75 = arith.constant 0 : index
    %c0_76 = arith.constant 0 : index
    %232 = vector.load %arg1[%c14, %c0_74, %c0_75, %c0_76] : memref<16x2x9x9xf32, #tpu.memory_space<vmem>>, vector<1x2x9x9xf32>
    %233 = vector.shape_cast %232 : vector<1x2x9x9xf32> to vector<2x9x9xf32>
    %c21_i32_77 = arith.constant 21 : i32
    %234 = arith.addi %0, %c21_i32_77 : i32
    %c1_i32_78 = arith.constant 1 : i32
    %235 = arith.addi %234, %c1_i32_78 : i32
    %236 = arith.index_cast %235 : i32 to index
    %237 = memref.load %arg2[%236] : memref<288xf32, #tpu.memory_space<smem>>
    %238 = vector.extract_strided_slice %233 {offsets = [0, 0, 0], sizes = [2, 8, 8], strides = [1, 1, 1]} : vector<2x9x9xf32> to vector<2x8x8xf32>
    %239 = vector.broadcast %237 : f32 to vector<2x8x8xf32>
    %240 = arith.mulf %239, %238 : vector<2x8x8xf32>
    %241 = arith.addf %231, %240 : vector<2x8x8xf32>
    %c3 = arith.constant 3 : index
    %c0_79 = arith.constant 0 : index
    %c0_80 = arith.constant 0 : index
    %c0_81 = arith.constant 0 : index
    %242 = vector.load %arg1[%c3, %c0_79, %c0_80, %c0_81] : memref<16x2x9x9xf32, #tpu.memory_space<vmem>>, vector<1x2x9x9xf32>
    %243 = vector.shape_cast %242 : vector<1x2x9x9xf32> to vector<2x9x9xf32>
    %c27_i32 = arith.constant 27 : i32
    %244 = arith.addi %0, %c27_i32 : i32
    %c0_i32_82 = arith.constant 0 : i32
    %245 = arith.addi %244, %c0_i32_82 : i32
    %246 = arith.index_cast %245 : i32 to index
    %247 = memref.load %arg2[%246] : memref<288xf32, #tpu.memory_space<smem>>
    %248 = vector.extract_strided_slice %243 {offsets = [0, 0, 0], sizes = [2, 8, 8], strides = [1, 1, 1]} : vector<2x9x9xf32> to vector<2x8x8xf32>
    %249 = vector.broadcast %247 : f32 to vector<2x8x8xf32>
    %250 = arith.mulf %249, %248 : vector<2x8x8xf32>
    %251 = arith.addf %241, %250 : vector<2x8x8xf32>
    %c27_i32_83 = arith.constant 27 : i32
    %252 = arith.addi %0, %c27_i32_83 : i32
    %c2_i32_84 = arith.constant 2 : i32
    %253 = arith.addi %252, %c2_i32_84 : i32
    %254 = arith.index_cast %253 : i32 to index
    %255 = memref.load %arg2[%254] : memref<288xf32, #tpu.memory_space<smem>>
    %256 = vector.extract_strided_slice %243 {offsets = [0, 0, 1], sizes = [2, 8, 8], strides = [1, 1, 1]} : vector<2x9x9xf32> to vector<2x8x8xf32>
    %257 = vector.broadcast %255 : f32 to vector<2x8x8xf32>
    %258 = arith.mulf %257, %256 : vector<2x8x8xf32>
    %259 = arith.addf %251, %258 : vector<2x8x8xf32>
    %c33_i32 = arith.constant 33 : i32
    %260 = arith.addi %0, %c33_i32 : i32
    %c0_i32_85 = arith.constant 0 : i32
    %261 = arith.addi %260, %c0_i32_85 : i32
    %262 = arith.index_cast %261 : i32 to index
    %263 = memref.load %arg2[%262] : memref<288xf32, #tpu.memory_space<smem>>
    %264 = vector.extract_strided_slice %243 {offsets = [0, 1, 0], sizes = [2, 8, 8], strides = [1, 1, 1]} : vector<2x9x9xf32> to vector<2x8x8xf32>
    %265 = vector.broadcast %263 : f32 to vector<2x8x8xf32>
    %266 = arith.mulf %265, %264 : vector<2x8x8xf32>
    %267 = arith.addf %259, %266 : vector<2x8x8xf32>
    %c33_i32_86 = arith.constant 33 : i32
    %268 = arith.addi %0, %c33_i32_86 : i32
    %c2_i32_87 = arith.constant 2 : i32
    %269 = arith.addi %268, %c2_i32_87 : i32
    %270 = arith.index_cast %269 : i32 to index
    %271 = memref.load %arg2[%270] : memref<288xf32, #tpu.memory_space<smem>>
    %272 = vector.extract_strided_slice %243 {offsets = [0, 1, 1], sizes = [2, 8, 8], strides = [1, 1, 1]} : vector<2x9x9xf32> to vector<2x8x8xf32>
    %273 = vector.broadcast %271 : f32 to vector<2x8x8xf32>
    %274 = arith.mulf %273, %272 : vector<2x8x8xf32>
    %275 = arith.addf %267, %274 : vector<2x8x8xf32>
    %c7 = arith.constant 7 : index
    %c0_88 = arith.constant 0 : index
    %c0_89 = arith.constant 0 : index
    %c0_90 = arith.constant 0 : index
    %276 = vector.load %arg1[%c7, %c0_88, %c0_89, %c0_90] : memref<16x2x9x9xf32, #tpu.memory_space<vmem>>, vector<1x2x9x9xf32>
    %277 = vector.shape_cast %276 : vector<1x2x9x9xf32> to vector<2x9x9xf32>
    %c27_i32_91 = arith.constant 27 : i32
    %278 = arith.addi %0, %c27_i32_91 : i32
    %c1_i32_92 = arith.constant 1 : i32
    %279 = arith.addi %278, %c1_i32_92 : i32
    %280 = arith.index_cast %279 : i32 to index
    %281 = memref.load %arg2[%280] : memref<288xf32, #tpu.memory_space<smem>>
    %282 = vector.extract_strided_slice %277 {offsets = [0, 0, 0], sizes = [2, 8, 8], strides = [1, 1, 1]} : vector<2x9x9xf32> to vector<2x8x8xf32>
    %283 = vector.broadcast %281 : f32 to vector<2x8x8xf32>
    %284 = arith.mulf %283, %282 : vector<2x8x8xf32>
    %285 = arith.addf %275, %284 : vector<2x8x8xf32>
    %c33_i32_93 = arith.constant 33 : i32
    %286 = arith.addi %0, %c33_i32_93 : i32
    %c1_i32_94 = arith.constant 1 : i32
    %287 = arith.addi %286, %c1_i32_94 : i32
    %288 = arith.index_cast %287 : i32 to index
    %289 = memref.load %arg2[%288] : memref<288xf32, #tpu.memory_space<smem>>
    %290 = vector.extract_strided_slice %277 {offsets = [0, 1, 0], sizes = [2, 8, 8], strides = [1, 1, 1]} : vector<2x9x9xf32> to vector<2x8x8xf32>
    %291 = vector.broadcast %289 : f32 to vector<2x8x8xf32>
    %292 = arith.mulf %291, %290 : vector<2x8x8xf32>
    %293 = arith.addf %285, %292 : vector<2x8x8xf32>
    %c11 = arith.constant 11 : index
    %c0_95 = arith.constant 0 : index
    %c0_96 = arith.constant 0 : index
    %c0_97 = arith.constant 0 : index
    %294 = vector.load %arg1[%c11, %c0_95, %c0_96, %c0_97] : memref<16x2x9x9xf32, #tpu.memory_space<vmem>>, vector<1x2x9x9xf32>
    %295 = vector.shape_cast %294 : vector<1x2x9x9xf32> to vector<2x9x9xf32>
    %c30_i32 = arith.constant 30 : i32
    %296 = arith.addi %0, %c30_i32 : i32
    %c0_i32_98 = arith.constant 0 : i32
    %297 = arith.addi %296, %c0_i32_98 : i32
    %298 = arith.index_cast %297 : i32 to index
    %299 = memref.load %arg2[%298] : memref<288xf32, #tpu.memory_space<smem>>
    %300 = vector.extract_strided_slice %295 {offsets = [0, 0, 0], sizes = [2, 8, 8], strides = [1, 1, 1]} : vector<2x9x9xf32> to vector<2x8x8xf32>
    %301 = vector.broadcast %299 : f32 to vector<2x8x8xf32>
    %302 = arith.mulf %301, %300 : vector<2x8x8xf32>
    %303 = arith.addf %293, %302 : vector<2x8x8xf32>
    %c30_i32_99 = arith.constant 30 : i32
    %304 = arith.addi %0, %c30_i32_99 : i32
    %c2_i32_100 = arith.constant 2 : i32
    %305 = arith.addi %304, %c2_i32_100 : i32
    %306 = arith.index_cast %305 : i32 to index
    %307 = memref.load %arg2[%306] : memref<288xf32, #tpu.memory_space<smem>>
    %308 = vector.extract_strided_slice %295 {offsets = [0, 0, 1], sizes = [2, 8, 8], strides = [1, 1, 1]} : vector<2x9x9xf32> to vector<2x8x8xf32>
    %309 = vector.broadcast %307 : f32 to vector<2x8x8xf32>
    %310 = arith.mulf %309, %308 : vector<2x8x8xf32>
    %311 = arith.addf %303, %310 : vector<2x8x8xf32>
    %c15 = arith.constant 15 : index
    %c0_101 = arith.constant 0 : index
    %c0_102 = arith.constant 0 : index
    %c0_103 = arith.constant 0 : index
    %312 = vector.load %arg1[%c15, %c0_101, %c0_102, %c0_103] : memref<16x2x9x9xf32, #tpu.memory_space<vmem>>, vector<1x2x9x9xf32>
    %313 = vector.shape_cast %312 : vector<1x2x9x9xf32> to vector<2x9x9xf32>
    %c30_i32_104 = arith.constant 30 : i32
    %314 = arith.addi %0, %c30_i32_104 : i32
    %c1_i32_105 = arith.constant 1 : i32
    %315 = arith.addi %314, %c1_i32_105 : i32
    %316 = arith.index_cast %315 : i32 to index
    %317 = memref.load %arg2[%316] : memref<288xf32, #tpu.memory_space<smem>>
    %318 = vector.extract_strided_slice %313 {offsets = [0, 0, 0], sizes = [2, 8, 8], strides = [1, 1, 1]} : vector<2x9x9xf32> to vector<2x8x8xf32>
    %319 = vector.broadcast %317 : f32 to vector<2x8x8xf32>
    %320 = arith.mulf %319, %318 : vector<2x8x8xf32>
    %321 = arith.addf %311, %320 : vector<2x8x8xf32>
    %322 = arith.index_cast %arg0 : i32 to index
    %323 = memref.load %arg3[%322] : memref<8xf32, #tpu.memory_space<smem>>
    %324 = vector.broadcast %323 : f32 to vector<2x8x8xf32>
    %325 = arith.addf %321, %324 : vector<2x8x8xf32>
    %cst_106 = arith.constant 0.000000e+00 : f32
    %326 = vector.broadcast %cst_106 : f32 to vector<2x8x8xf32>
    %327 = arith.cmpf oge, %325, %326 : vector<2x8x8xf32>
    %cst_107 = arith.constant 2.000000e-01 : f32
    %328 = vector.broadcast %cst_107 : f32 to vector<2x8x8xf32>
    %329 = arith.mulf %328, %325 : vector<2x8x8xf32>
    %330 = arith.select %327, %325, %329 : vector<2x8x8xi1>, vector<2x8x8xf32>
    %c0_108 = arith.constant 0 : index
    %c0_109 = arith.constant 0 : index
    %c0_110 = arith.constant 0 : index
    %c0_111 = arith.constant 0 : index
    %331 = vector.load %arg4[%c0_108, %c0_109, %c0_110, %c0_111] : memref<2x1x8x8xf32, #tpu.memory_space<vmem>>, vector<2x1x8x8xf32>
    %332 = vector.shape_cast %331 : vector<2x1x8x8xf32> to vector<2x8x8xf32>
    %333 = vector.shape_cast %330 : vector<2x8x8xf32> to vector<2x1x8x8xf32>
    tpu.vector_store %arg4[%c0_108, %c0_109, %c0_110, %c0_111], %333 {strides = array<i32>} : memref<2x1x8x8xf32, #tpu.memory_space<vmem>>, vector<2x1x8x8xf32>,
    return
  }
  func.func @transform_0(%arg0: i32) -> (i32, i32, i32, i32) {
    %c0_i32 = arith.constant 0 : i32
    %c0_i32_0 = arith.constant 0 : i32
    %c0_i32_1 = arith.constant 0 : i32
    %c0_i32_2 = arith.constant 0 : i32
    %c0_i32_3 = arith.constant 0 : i32
    return %c0_i32, %c0_i32_0, %c0_i32_1, %c0_i32_2 : i32, i32, i32, i32
  }
  func.func @transform_1(%arg0: i32) -> i32 {
    %c0_i32 = arith.constant 0 : i32
    %c0_i32_0 = arith.constant 0 : i32
    return %c0_i32 : i32
  }
  func.func @transform_2(%arg0: i32) -> i32 {
    %c0_i32 = arith.constant 0 : i32
    %c0_i32_0 = arith.constant 0 : i32
    return %c0_i32 : i32
  }
  func.func @transform_3(%arg0: i32) -> (i32, i32, i32, i32) {
    %c0_i32 = arith.constant 0 : i32
    %c0_i32_0 = arith.constant 0 : i32
    %c0_i32_1 = arith.constant 0 : i32
    %c0_i32_2 = arith.constant 0 : i32
    return %c0_i32, %arg0, %c0_i32_0, %c0_i32_1 : i32, i32, i32, i32
  }
}

</mosaic_0001>

<llo_original>
// kernel: tpu_custom_call.1
$region0: #{tpu_custom_call.1}
  #allocation0 [shape = 'u32[]', space=smem, size = 0x4, offset = 0x4, fixed_abs, tag = 'smem constant byte address 0x4 - core index']
  #allocation1 [shape = 'u32[144,128]{1,0:T(1,128)}', space=vmem, size = 0x12000, scoped, tag = 'internal scratch']
  %s0 = inlined_call_operand.vmem [shape: f32[16,2,9,9], index: 0, kind: input, shape index: {}]
  %s1 = inlined_call_operand.vmem [shape: f32[288], index: 1, kind: input, shape index: {}]
  %s2 = inlined_call_operand.vmem [shape: f32[8], index: 2, kind: input, shape index: {}]
  %s3 = inlined_call_operand.hbm [shape: f32[2,8,8,8], index: 3, kind: output, shape index: {}]
  %s4 = sld [smem:[#allocation0]]
  $region53: #{tpu_custom_call.1} parent=0
    _
  %s6 = ssub.s32 1, %s4
  %s7 = scalar_select 0, %s6, %s4
  $region1: #{tpu_custom_call.1} parent=0
    #allocation2 [shape = 'u8[1536]{0}', space=smem, size = 0x600, scoped, tag = 'input window, operand 1, single buffered']
    #allocation3 [shape = 's32[2]{0}', space=sflag, size = 0x8, scoped, tag = 'scoped memory for tpu_custom_call.1']
    #allocation4 [shape = 's32[2]{0}', space=sflag, size = 0x8, scoped, tag = 'scoped memory for tpu_custom_call.1']
    #allocation5 [shape = 'u8[512]{0}', space=smem, size = 0x200, scoped, tag = 'input window, operand 2, single buffered']
    #allocation6 [shape = 's32[1]{0}', space=sflag, size = 0x4, scoped, tag = 'scoped memory for tpu_custom_call.1']
    #allocation7 [shape = 'u8[16384]{0}', space=vmem, size = 0x4000, scoped, tag = 'output window, operand 0']
    %8 = vsyncpa [#allocation4], 0
    %9 = vsyncpa [#allocation6], 0
    %10 = vsyncpa [#allocation3], 0
    %s11 = scalar_lea.sflag [#allocation3], 1
    %12 = vsyncpa %s11, 0
    loop: start=0, step=1, limit=10
    $region2: #{tpu_custom_call.1} parent=1 // loop_pre_header
      _
    $region3: #{tpu_custom_call.1} parent=1 // loop_header
      %s14 = sphi 0, %s18
      %p15 = scmp.ge.s32.totalorder %s14, 10
      %s22 = sphi 0, %s22
      %s24 = sphi 0, %s22
      %s25 = sphi 0, %s24
      %s39 = sphi 0, %s25
      %s43 = sphi 0, %s43
      %s45 = sphi 0, %s43
      %s46 = sphi 0, %s45
      %s60 = sphi 0, %s46
      %s64 = sphi 0, %s64
      %s66 = sphi 0, %s64
      %s67 = sphi 0, %s66
      %s81 = sphi 0, %s67
      %s87 = sphi 0, %s89
      %s90 = sphi 0, %s87
      %s91 = sphi 0, %s90
      %s107 = sphi 0, %s91
    $region4: #{tpu_custom_call.1} parent=1 // loop_header_branch
      %17 = sbr.rel (%p15) target = $region8
    $region5: #{tpu_custom_call.1} parent=1 // loop_body
      %s19 = ssub.s32 %s14, 1
      %s20 = ssub.s32 %s14, 2
      %s21 = sadd.s32 %s14, 1
      %s23 = sadd.s32 %s22, 1
      %p26 = scmp.eq.s32.totalorder %s14, 7
      %p27 = scmp.ne.s32.totalorder %s22, %s24
      %p28 = scmp.eq.s32.totalorder %s14, 0
      %p29 = por %p27, %p28
      %p30 = scmp.ne.s32.totalorder %s22, %s24
      %p31 = scmp.eq.s32.totalorder %s19, 7
      %p32 = por %p30, %p31
      %p33 = scmp.ne.s32.totalorder %s24, %s25
      %p34 = scmp.eq.s32.totalorder %s19, 0
      %p35 = por %p33, %p34
      %p36 = scmp.ne.s32.totalorder %s24, %s25
      %p37 = scmp.eq.s32.totalorder %s20, 7
      %p38 = por %p36, %p37
      %p40 = scmp.ne.s32.totalorder %s25, %s39
      %p41 = scmp.eq.s32.totalorder %s20, 0
      %p42 = por %p40, %p41
      %s44 = sadd.s32 %s43, 1
      %p47 = scmp.eq.s32.totalorder %s14, 7
      %p48 = scmp.ne.s32.totalorder %s43, %s45
      %p49 = scmp.eq.s32.totalorder %s14, 0
      %p50 = por %p48, %p49
      %p51 = scmp.ne.s32.totalorder %s43, %s45
      %p52 = scmp.eq.s32.totalorder %s19, 7
      %p53 = por %p51, %p52
      %p54 = scmp.ne.s32.totalorder %s45, %s46
      %p55 = scmp.eq.s32.totalorder %s19, 0
      %p56 = por %p54, %p55
      %p57 = scmp.ne.s32.totalorder %s45, %s46
      %p58 = scmp.eq.s32.totalorder %s20, 7
      %p59 = por %p57, %p58
      %p61 = scmp.ne.s32.totalorder %s46, %s60
      %p62 = scmp.eq.s32.totalorder %s20, 0
      %p63 = por %p61, %p62
      %s65 = sadd.s32 %s64, 1
      %p68 = scmp.eq.s32.totalorder %s14, 7
      %p69 = scmp.ne.s32.totalorder %s64, %s66
      %p70 = scmp.eq.s32.totalorder %s14, 0
      %p71 = por %p69, %p70
      %p72 = scmp.ne.s32.totalorder %s64, %s66
      %p73 = scmp.eq.s32.totalorder %s19, 7
      %p74 = por %p72, %p73
      %p75 = scmp.ne.s32.totalorder %s66, %s67
      %p76 = scmp.eq.s32.totalorder %s19, 0
      %p77 = por %p75, %p76
      %p78 = scmp.ne.s32.totalorder %s66, %s67
      %p79 = scmp.eq.s32.totalorder %s20, 7
      %p80 = por %p78, %p79
      %p82 = scmp.ne.s32.totalorder %s67, %s81
      %p83 = scmp.eq.s32.totalorder %s20, 0
      %p84 = por %p82, %p83
      %s85 = ssub.s32 %s14, %s21
      %p86 = scmp.eq.s32.totalorder %s85, 0
      %s88 = sadd.s32 %s87, 1
      %s89 = scalar_select %p86, %s87, %s88
      %p92 = pneg %p86
      %p93 = scmp.eq.s32.totalorder %s14, 7
      %p94 = por %p92, %p93
      %p95 = scmp.ne.s32.totalorder %s87, %s90
      %p96 = scmp.eq.s32.totalorder %s14, 0
      %p97 = por %p95, %p96
      %p98 = scmp.ne.s32.totalorder %s87, %s90
      %p99 = scmp.eq.s32.totalorder %s19, 7
      %p100 = por %p98, %p99
      %p101 = scmp.ne.s32.totalorder %s90, %s91
      %p102 = scmp.eq.s32.totalorder %s19, 0
      %p103 = por %p101, %p102
      %p104 = scmp.ne.s32.totalorder %s90, %s91
      %p105 = scmp.eq.s32.totalorder %s20, 7
      %p106 = por %p104, %p105
      %p108 = scmp.ne.s32.totalorder %s91, %s107
      %p109 = scmp.eq.s32.totalorder %s20, 0
      %p110 = por %p108, %p109
      %p111 = scmp.le.s32.totalorder 1, %s14
      %p112 = scmp.lt.s32.totalorder %s14, 9
      %p113 = pnand %p111, %p112
      %p114 = pneg %p113
      // Predicated region
      $region9: #{tpu_custom_call.1} parent=5 // pred_check
        _
      $region10: #{tpu_custom_call.1} parent=5 // pred_check_branch
        %116 = sbr.rel (%p113) target = $region12
      $region11: #{tpu_custom_call.1} parent=5 // pred_region
        %s117 = ssub.s32 %s14, 1
        // Predicated region
        $region13: #{tpu_custom_call.1} parent=11 // pred_check
          %p118 = pneg %p35
        $region14: #{tpu_custom_call.1} parent=11 // pred_check_branch
          %120 = sbr.rel (%p118) target = $region16
        $region15: #{tpu_custom_call.1} parent=11 // pred_region
          _
        $region16: #{tpu_custom_call.1} parent=11 // pred_fallthru
          _
        // Predicated region
        $region17: #{tpu_custom_call.1} parent=11 // pred_check
          %p121 = pneg %p56
        $region18: #{tpu_custom_call.1} parent=11 // pred_check_branch
          %123 = sbr.rel (%p121) target = $region20
        $region19: #{tpu_custom_call.1} parent=11 // pred_region
          %s125 = ssub.s32 48, 48
          %126 = vsyncadd [#allocation4], %s125
          %s128 = sshll.u32 %s1, 4
          %s129 = int_to_ptr.vmem [resolvable:$true] %s128
          %131 = dma.vmem_to_smem %s129, 48, [#allocation2], [#allocation4]
        $region20: #{tpu_custom_call.1} parent=11 // pred_fallthru
          _
        // Predicated region
        $region21: #{tpu_custom_call.1} parent=11 // pred_check
          %p132 = pneg %p77
        $region22: #{tpu_custom_call.1} parent=11 // pred_check_branch
          %134 = sbr.rel (%p132) target = $region24
        $region23: #{tpu_custom_call.1} parent=11 // pred_region
          %s136 = ssub.s32 16, 16
          %137 = vsyncadd [#allocation6], %s136
          %s139 = sshll.u32 %s2, 4
          %s140 = int_to_ptr.vmem [resolvable:$true] %s139
          %142 = dma.vmem_to_smem %s140, 16, [#allocation5], [#allocation6]
        $region24: #{tpu_custom_call.1} parent=11 // pred_fallthru
          _
      $region12: #{tpu_custom_call.1} parent=5 // pred_fallthru
        _
      %p143 = scmp.lt.s32.totalorder %s14, 8
      // Predicated region
      $region25: #{tpu_custom_call.1} parent=5 // pred_check
        %p144 = pneg %p143
      $region26: #{tpu_custom_call.1} parent=5 // pred_check_branch
        %146 = sbr.rel (%p144) target = $region28
      $region27: #{tpu_custom_call.1} parent=5 // pred_region
        _
      $region28: #{tpu_custom_call.1} parent=5 // pred_fallthru
        _
      %p147 = scmp.le.s32.totalorder 1, %s14
      %p148 = scmp.lt.s32.totalorder %s14, 9
      %p149 = pnand %p147, %p148
      %p150 = pneg %p149
      // Predicated region
      $region29: #{tpu_custom_call.1} parent=5 // pred_check
        _
      $region30: #{tpu_custom_call.1} parent=5 // pred_check_branch
        %152 = sbr.rel (%p149) target = $region32
      $region31: #{tpu_custom_call.1} parent=5 // pred_region
        %s153 = ssub.s32 %s14, 1
        // Predicated region
        $region33: #{tpu_custom_call.1} parent=31 // pred_check
          %p154 = pneg %p56
        $region34: #{tpu_custom_call.1} parent=31 // pred_check_branch
          %156 = sbr.rel (%p154) target = $region36
        $region35: #{tpu_custom_call.1} parent=31 // pred_region
          %157 = dma.done [#allocation4], 48
        $region36: #{tpu_custom_call.1} parent=31 // pred_fallthru
          _
        // Predicated region
        $region37: #{tpu_custom_call.1} parent=31 // pred_check
          %p158 = pneg %p77
        $region38: #{tpu_custom_call.1} parent=31 // pred_check_branch
          %160 = sbr.rel (%p158) target = $region40
        $region39: #{tpu_custom_call.1} parent=31 // pred_region
          %161 = dma.done [#allocation6], 16
        $region40: #{tpu_custom_call.1} parent=31 // pred_fallthru
          _
        %162 = sfence
        %p163 = pneg %p35
        %p164 = pneg %p32
        %p165 = pneg %p56
        %p166 = pneg %p53
        %p167 = pneg %p77
        %p168 = pneg %p74
        %p169 = pneg %p103
        %p170 = pneg %p100
        %s171 = sand.u32 %s90, 1
        %s172 = scalar_lea.sflag [#allocation3], %s171
        %s173 = sand.u32 %s90, 1
        %s174 = smul.addr %s173, 16
        %s175 = scalar_lea.vmem [#allocation7], %s174
        %s176 = smul.u32 %s19, 36
        %v177 = vld [vmem:[%s0] sm:$0xff]
        %v178 = vld [vmem:[%s0 + $0x8] sm:$0x1]
        %v179 = vld [vmem:[%s0 + $0x10] sm:$0xff]
        %v180 = vld [vmem:[%s0 + $0x18] sm:$0x1]
        %s181 = sld [smem:[#allocation2 + %s176]]
        %v182 = vstv %s181
        %v183 = vmul.f32 %v182, %v177
        %v184 = vmul.f32 %v182, %v179
        %v185 = vadd.f32 %v183, 0.0
        %v186 = vadd.f32 %v184, 0.0
        %s187 = sadd.s32 %s176, 2
        %s188 = sld [smem:[#allocation2 + %s187]]
        %v189 = vstv %s188
        %v190 = vmul.f32 %v189, %v177
        %v191 = vmul.f32 %v189, %v179
        %194 = vrot.lane.b32.xlu0 %v190, 127
        %v195 = vpop.permute.xlu0 %194
        %196 = vrot.lane.b32.xlu0 %v191, 127
        %v197 = vpop.permute.xlu0 %196
        %v200 = vadd.f32 %v185, %v195
        %v201 = vadd.f32 %v186, %v197
        %s202 = sadd.s32 %s176, 6
        %s203 = sld [smem:[#allocation2 + %s202]]
        %v204 = vstv %s203
        %v205 = vmul.f32 %v204, %v177
        %v206 = vmul.f32 %v204, %v178
        %v207 = vmul.f32 %v204, %v179
        %v208 = vmul.f32 %v204, %v180
        %vm213 = vcmask 1046528
        %v214 = vrot.slane %v205, 1
        %v215 = vrot.slane %v206, 1
        %v216 = vsel %vm213, %v214, %v215
        %v217 = vrot.slane %v207, 1
        %v218 = vrot.slane %v208, 1
        %v219 = vsel %vm213, %v217, %v218
        %v222 = vadd.f32 %v200, %v216
        %v223 = vadd.f32 %v201, %v219
        %s224 = sadd.s32 %s176, 8
        %s225 = sld [smem:[#allocation2 + %s224]]
        %v226 = vstv %s225
        %v227 = vmul.f32 %v226, %v177
        %v228 = vmul.f32 %v226, %v178
        %v229 = vmul.f32 %v226, %v179
        %v230 = vmul.f32 %v226, %v180
        %v235 = vrot.slane %v227, 1
        %v236 = vrot.slane %v228, 1
        %v237 = vsel %vm213, %v235, %v236
        %v238 = vrot.slane %v229, 1
        %v239 = vrot.slane %v230, 1
        %v240 = vsel %vm213, %v238, %v239
        %241 = vrot.lane.b32.xlu0 %v237, 127
        %v242 = vpop.permute.xlu0 %241
        %243 = vrot.lane.b32.xlu0 %v240, 127
        %v244 = vpop.permute.xlu0 %243
        %v247 = vadd.f32 %v222, %v242
        %v248 = vadd.f32 %v223, %v244
        %s249 = scalar_lea.vmem %s0, 128
        %v250 = vld [vmem:[%s249] sm:$0xff]
        %v251 = vld [vmem:[%s249 + $0x8] sm:$0x1]
        %v252 = vld [vmem:[%s249 + $0x10] sm:$0xff]
        %v253 = vld [vmem:[%s249 + $0x18] sm:$0x1]
        %s254 = sadd.s32 %s176, 1
        %s255 = sld [smem:[#allocation2 + %s254]]
        %v256 = vstv %s255
        %v257 = vmul.f32 %v256, %v250
        %v258 = vmul.f32 %v256, %v252
        %v259 = vadd.f32 %v247, %v257
        %v260 = vadd.f32 %v248, %v258
        %s261 = sadd.s32 %s176, 7
        %s262 = sld [smem:[#allocation2 + %s261]]
        %v263 = vstv %s262
        %v264 = vmul.f32 %v263, %v250
        %v265 = vmul.f32 %v263, %v251
        %v266 = vmul.f32 %v263, %v252
        %v267 = vmul.f32 %v263, %v253
        %v272 = vrot.slane %v264, 1
        %v273 = vrot.slane %v265, 1
        %v274 = vsel %vm213, %v272, %v273
        %v275 = vrot.slane %v266, 1
        %v276 = vrot.slane %v267, 1
        %v277 = vsel %vm213, %v275, %v276
        %v280 = vadd.f32 %v259, %v274
        %v281 = vadd.f32 %v260, %v277
        %s282 = scalar_lea.vmem %s0, 256
        %v283 = vld [vmem:[%s282] sm:$0xff]
        %v284 = vld [vmem:[%s282 + $0x10] sm:$0xff]
        %s285 = sadd.s32 %s176, 3
        %s286 = sld [smem:[#allocation2 + %s285]]
        %v287 = vstv %s286
        %v288 = vmul.f32 %v287, %v283
        %v289 = vmul.f32 %v287, %v284
        %v290 = vadd.f32 %v280, %v288
        %v291 = vadd.f32 %v281, %v289
        %s292 = sadd.s32 %s176, 5
        %s293 = sld [smem:[#allocation2 + %s292]]
        %v294 = vstv %s293
        %v295 = vmul.f32 %v294, %v283
        %v296 = vmul.f32 %v294, %v284
        %299 = vrot.lane.b32.xlu0 %v295, 127
        %v300 = vpop.permute.xlu0 %299
        %301 = vrot.lane.b32.xlu0 %v296, 127
        %v302 = vpop.permute.xlu0 %301
        %v305 = vadd.f32 %v290, %v300
        %v306 = vadd.f32 %v291, %v302
        %s307 = scalar_lea.vmem %s0, 384
        %v308 = vld [vmem:[%s307] sm:$0xff]
        %v309 = vld [vmem:[%s307 + $0x10] sm:$0xff]
        %s310 = sadd.s32 %s176, 4
        %s311 = sld [smem:[#allocation2 + %s310]]
        %v312 = vstv %s311
        %v313 = vmul.f32 %v312, %v308
        %v314 = vmul.f32 %v312, %v309
        %v315 = vadd.f32 %v305, %v313
        %v316 = vadd.f32 %v306, %v314
        %s317 = scalar_lea.vmem %s0, 32
        %v318 = vld [vmem:[%s317] sm:$0xff]
        %v319 = vld [vmem:[%s317 + $0x8] sm:$0x1]
        %v320 = vld [vmem:[%s317 + $0x10] sm:$0xff]
        %v321 = vld [vmem:[%s317 + $0x18] sm:$0x1]
        %s322 = sadd.s32 %s176, 9
        %s323 = sld [smem:[#allocation2 + %s322]]
        %v324 = vstv %s323
        %v325 = vmul.f32 %v324, %v318
        %v326 = vmul.f32 %v324, %v320
        %v327 = vadd.f32 %v315, %v325
        %v328 = vadd.f32 %v316, %v326
        %s329 = sadd.s32 %s176, 11
        %s330 = sld [smem:[#allocation2 + %s329]]
        %v331 = vstv %s330
        %v332 = vmul.f32 %v331, %v318
        %v333 = vmul.f32 %v331, %v320
        %336 = vrot.lane.b32.xlu0 %v332, 127
        %v337 = vpop.permute.xlu0 %336
        %338 = vrot.lane.b32.xlu0 %v333, 127
        %v339 = vpop.permute.xlu0 %338
        %v342 = vadd.f32 %v327, %v337
        %v343 = vadd.f32 %v328, %v339
        %s344 = sadd.s32 %s176, 15
        %s345 = sld [smem:[#allocation2 + %s344]]
        %v346 = vstv %s345
        %v347 = vmul.f32 %v346, %v318
        %v348 = vmul.f32 %v346, %v319
        %v349 = vmul.f32 %v346, %v320
        %v350 = vmul.f32 %v346, %v321
        %v355 = vrot.slane %v347, 1
        %v356 = vrot.slane %v348, 1
        %v357 = vsel %vm213, %v355, %v356
        %v358 = vrot.slane %v349, 1
        %v359 = vrot.slane %v350, 1
        %v360 = vsel %vm213, %v358, %v359
        %v363 = vadd.f32 %v342, %v357
        %v364 = vadd.f32 %v343, %v360
        %s365 = sadd.s32 %s176, 17
        %s366 = sld [smem:[#allocation2 + %s365]]
        %v367 = vstv %s366
        %v368 = vmul.f32 %v367, %v318
        %v369 = vmul.f32 %v367, %v319
        %v370 = vmul.f32 %v367, %v320
        %v371 = vmul.f32 %v367, %v321
        %v376 = vrot.slane %v368, 1
        %v377 = vrot.slane %v369, 1
        %v378 = vsel %vm213, %v376, %v377
        %v379 = vrot.slane %v370, 1
        %v380 = vrot.slane %v371, 1
        %v381 = vsel %vm213, %v379, %v380
        %382 = vrot.lane.b32.xlu0 %v378, 127
        %v383 = vpop.permute.xlu0 %382
        %384 = vrot.lane.b32.xlu0 %v381, 127
        %v385 = vpop.permute.xlu0 %384
        %v388 = vadd.f32 %v363, %v383
        %v389 = vadd.f32 %v364, %v385
        %s390 = scalar_lea.vmem %s0, 160
        %v391 = vld [vmem:[%s390] sm:$0xff]
        %v392 = vld [vmem:[%s390 + $0x8] sm:$0x1]
        %v393 = vld [vmem:[%s390 + $0x10] sm:$0xff]
        %v394 = vld [vmem:[%s390 + $0x18] sm:$0x1]
        %s395 = sadd.s32 %s176, 10
        %s396 = sld [smem:[#allocation2 + %s395]]
        %v397 = vstv %s396
        %v398 = vmul.f32 %v397, %v391
        %v399 = vmul.f32 %v397, %v393
        %v400 = vadd.f32 %v388, %v398
        %v401 = vadd.f32 %v389, %v399
        %s402 = sadd.s32 %s176, 16
        %s403 = sld [smem:[#allocation2 + %s402]]
        %v404 = vstv %s403
        %v405 = vmul.f32 %v404, %v391
        %v406 = vmul.f32 %v404, %v392
        %v407 = vmul.f32 %v404, %v393
        %v408 = vmul.f32 %v404, %v394
        %v413 = vrot.slane %v405, 1
        %v414 = vrot.slane %v406, 1
        %v415 = vsel %vm213, %v413, %v414
        %v416 = vrot.slane %v407, 1
        %v417 = vrot.slane %v408, 1
        %v418 = vsel %vm213, %v416, %v417
        %v421 = vadd.f32 %v400, %v415
        %v422 = vadd.f32 %v401, %v418
        %s423 = scalar_lea.vmem %s0, 288
        %v424 = vld [vmem:[%s423] sm:$0xff]
        %v425 = vld [vmem:[%s423 + $0x10] sm:$0xff]
        %s426 = sadd.s32 %s176, 12
        %s427 = sld [smem:[#allocation2 + %s426]]
        %v428 = vstv %s427
        %v429 = vmul.f32 %v428, %v424
        %v430 = vmul.f32 %v428, %v425
        %v431 = vadd.f32 %v421, %v429
        %v432 = vadd.f32 %v422, %v430
        %s433 = sadd.s32 %s176, 14
        %s434 = sld [smem:[#allocation2 + %s433]]
        %v435 = vstv %s434
        %v436 = vmul.f32 %v435, %v424
        %v437 = vmul.f32 %v435, %v425
        %440 = vrot.lane.b32.xlu0 %v436, 127
        %v441 = vpop.permute.xlu0 %440
        %442 = vrot.lane.b32.xlu0 %v437, 127
        %v443 = vpop.permute.xlu0 %442
        %v446 = vadd.f32 %v431, %v441
        %v447 = vadd.f32 %v432, %v443
        %s448 = scalar_lea.vmem %s0, 416
        %v449 = vld [vmem:[%s448] sm:$0xff]
        %v450 = vld [vmem:[%s448 + $0x10] sm:$0xff]
        %s451 = sadd.s32 %s176, 13
        %s452 = sld [smem:[#allocation2 + %s451]]
        %v453 = vstv %s452
        %v454 = vmul.f32 %v453, %v449
        %v455 = vmul.f32 %v453, %v450
        %v456 = vadd.f32 %v446, %v454
        %v457 = vadd.f32 %v447, %v455
        %s458 = scalar_lea.vmem %s0, 64
        %v459 = vld [vmem:[%s458] sm:$0xff]
        %v460 = vld [vmem:[%s458 + $0x8] sm:$0x1]
        %v461 = vld [vmem:[%s458 + $0x10] sm:$0xff]
        %v462 = vld [vmem:[%s458 + $0x18] sm:$0x1]
        %s463 = sadd.s32 %s176, 18
        %s464 = sld [smem:[#allocation2 + %s463]]
        %v465 = vstv %s464
        %v466 = vmul.f32 %v465, %v459
        %v467 = vmul.f32 %v465, %v461
        %v468 = vadd.f32 %v456, %v466
        %v469 = vadd.f32 %v457, %v467
        %s470 = sadd.s32 %s176, 20
        %s471 = sld [smem:[#allocation2 + %s470]]
        %v472 = vstv %s471
        %v473 = vmul.f32 %v472, %v459
        %v474 = vmul.f32 %v472, %v461
        %477 = vrot.lane.b32.xlu0 %v473, 127
        %v478 = vpop.permute.xlu0 %477
        %479 = vrot.lane.b32.xlu0 %v474, 127
        %v480 = vpop.permute.xlu0 %479
        %v483 = vadd.f32 %v468, %v478
        %v484 = vadd.f32 %v469, %v480
        %s485 = sadd.s32 %s176, 24
        %s486 = sld [smem:[#allocation2 + %s485]]
        %v487 = vstv %s486
        %v488 = vmul.f32 %v487, %v459
        %v489 = vmul.f32 %v487, %v460
        %v490 = vmul.f32 %v487, %v461
        %v491 = vmul.f32 %v487, %v462
        %v496 = vrot.slane %v488, 1
        %v497 = vrot.slane %v489, 1
        %v498 = vsel %vm213, %v496, %v497
        %v499 = vrot.slane %v490, 1
        %v500 = vrot.slane %v491, 1
        %v501 = vsel %vm213, %v499, %v500
        %v504 = vadd.f32 %v483, %v498
        %v505 = vadd.f32 %v484, %v501
        %s506 = sadd.s32 %s176, 26
        %s507 = sld [smem:[#allocation2 + %s506]]
        %v508 = vstv %s507
        %v509 = vmul.f32 %v508, %v459
        %v510 = vmul.f32 %v508, %v460
        %v511 = vmul.f32 %v508, %v461
        %v512 = vmul.f32 %v508, %v462
        %v517 = vrot.slane %v509, 1
        %v518 = vrot.slane %v510, 1
        %v519 = vsel %vm213, %v517, %v518
        %v520 = vrot.slane %v511, 1
        %v521 = vrot.slane %v512, 1
        %v522 = vsel %vm213, %v520, %v521
        %523 = vrot.lane.b32.xlu0 %v519, 127
        %v524 = vpop.permute.xlu0 %523
        %525 = vrot.lane.b32.xlu0 %v522, 127
        %v526 = vpop.permute.xlu0 %525
        %v529 = vadd.f32 %v504, %v524
        %v530 = vadd.f32 %v505, %v526
        %s531 = scalar_lea.vmem %s0, 192
        %v532 = vld [vmem:[%s531] sm:$0xff]
        %v533 = vld [vmem:[%s531 + $0x8] sm:$0x1]
        %v534 = vld [vmem:[%s531 + $0x10] sm:$0xff]
        %v535 = vld [vmem:[%s531 + $0x18] sm:$0x1]
        %s536 = sadd.s32 %s176, 19
        %s537 = sld [smem:[#allocation2 + %s536]]
        %v538 = vstv %s537
        %v539 = vmul.f32 %v538, %v532
        %v540 = vmul.f32 %v538, %v534
        %v541 = vadd.f32 %v529, %v539
        %v542 = vadd.f32 %v530, %v540
        %s543 = sadd.s32 %s176, 25
        %s544 = sld [smem:[#allocation2 + %s543]]
        %v545 = vstv %s544
        %v546 = vmul.f32 %v545, %v532
        %v547 = vmul.f32 %v545, %v533
        %v548 = vmul.f32 %v545, %v534
        %v549 = vmul.f32 %v545, %v535
        %v554 = vrot.slane %v546, 1
        %v555 = vrot.slane %v547, 1
        %v556 = vsel %vm213, %v554, %v555
        %v557 = vrot.slane %v548, 1
        %v558 = vrot.slane %v549, 1
        %v559 = vsel %vm213, %v557, %v558
        %v562 = vadd.f32 %v541, %v556
        %v563 = vadd.f32 %v542, %v559
        %s564 = scalar_lea.vmem %s0, 320
        %v565 = vld [vmem:[%s564] sm:$0xff]
        %v566 = vld [vmem:[%s564 + $0x10] sm:$0xff]
        %s567 = sadd.s32 %s176, 21
        %s568 = sld [smem:[#allocation2 + %s567]]
        %v569 = vstv %s568
        %v570 = vmul.f32 %v569, %v565
        %v571 = vmul.f32 %v569, %v566
        %v572 = vadd.f32 %v562, %v570
        %v573 = vadd.f32 %v563, %v571
        %s574 = sadd.s32 %s176, 23
        %s575 = sld [smem:[#allocation2 + %s574]]
        %v576 = vstv %s575
        %v577 = vmul.f32 %v576, %v565
        %v578 = vmul.f32 %v576, %v566
        %581 = vrot.lane.b32.xlu0 %v577, 127
        %v582 = vpop.permute.xlu0 %581
        %583 = vrot.lane.b32.xlu0 %v578, 127
        %v584 = vpop.permute.xlu0 %583
        %v587 = vadd.f32 %v572, %v582
        %v588 = vadd.f32 %v573, %v584
        %s589 = scalar_lea.vmem %s0, 448
        %v590 = vld [vmem:[%s589] sm:$0xff]
        %v591 = vld [vmem:[%s589 + $0x10] sm:$0xff]
        %s592 = sadd.s32 %s176, 22
        %s593 = sld [smem:[#allocation2 + %s592]]
        %v594 = vstv %s593
        %v595 = vmul.f32 %v594, %v590
        %v596 = vmul.f32 %v594, %v591
        %v597 = vadd.f32 %v587, %v595
        %v598 = vadd.f32 %v588, %v596
        %s599 = scalar_lea.vmem %s0, 96
        %v600 = vld [vmem:[%s599] sm:$0xff]
        %v601 = vld [vmem:[%s599 + $0x8] sm:$0x1]
        %v602 = vld [vmem:[%s599 + $0x10] sm:$0xff]
        %v603 = vld [vmem:[%s599 + $0x18] sm:$0x1]
        %s604 = sadd.s32 %s176, 27
        %s605 = sld [smem:[#allocation2 + %s604]]
        %v606 = vstv %s605
        %v607 = vmul.f32 %v606, %v600
        %v608 = vmul.f32 %v606, %v602
        %v609 = vadd.f32 %v597, %v607
        %v610 = vadd.f32 %v598, %v608
        %s611 = sadd.s32 %s176, 29
        %s612 = sld [smem:[#allocation2 + %s611]]
        %v613 = vstv %s612
        %v614 = vmul.f32 %v613, %v600
        %v615 = vmul.f32 %v613, %v602
        %618 = vrot.lane.b32.xlu0 %v614, 127
        %v619 = vpop.permute.xlu0 %618
        %620 = vrot.lane.b32.xlu0 %v615, 127
        %v621 = vpop.permute.xlu0 %620
        %v624 = vadd.f32 %v609, %v619
        %v625 = vadd.f32 %v610, %v621
        %s626 = sadd.s32 %s176, 33
        %s627 = sld [smem:[#allocation2 + %s626]]
        %v628 = vstv %s627
        %v629 = vmul.f32 %v628, %v600
        %v630 = vmul.f32 %v628, %v601
        %v631 = vmul.f32 %v628, %v602
        %v632 = vmul.f32 %v628, %v603
        %v637 = vrot.slane %v629, 1
        %v638 = vrot.slane %v630, 1
        %v639 = vsel %vm213, %v637, %v638
        %v640 = vrot.slane %v631, 1
        %v641 = vrot.slane %v632, 1
        %v642 = vsel %vm213, %v640, %v641
        %v645 = vadd.f32 %v624, %v639
        %v646 = vadd.f32 %v625, %v642
        %s647 = sadd.s32 %s176, 35
        %s648 = sld [smem:[#allocation2 + %s647]]
        %v649 = vstv %s648
        %v650 = vmul.f32 %v649, %v600
        %v651 = vmul.f32 %v649, %v601
        %v652 = vmul.f32 %v649, %v602
        %v653 = vmul.f32 %v649, %v603
        %v658 = vrot.slane %v650, 1
        %v659 = vrot.slane %v651, 1
        %v660 = vsel %vm213, %v658, %v659
        %v661 = vrot.slane %v652, 1
        %v662 = vrot.slane %v653, 1
        %v663 = vsel %vm213, %v661, %v662
        %664 = vrot.lane.b32.xlu0 %v660, 127
        %v665 = vpop.permute.xlu0 %664
        %666 = vrot.lane.b32.xlu0 %v663, 127
        %v667 = vpop.permute.xlu0 %666
        %v670 = vadd.f32 %v645, %v665
        %v671 = vadd.f32 %v646, %v667
        %s672 = scalar_lea.vmem %s0, 224
        %v673 = vld [vmem:[%s672] sm:$0xff]
        %v674 = vld [vmem:[%s672 + $0x8] sm:$0x1]
        %v675 = vld [vmem:[%s672 + $0x10] sm:$0xff]
        %v676 = vld [vmem:[%s672 + $0x18] sm:$0x1]
        %s677 = sadd.s32 %s176, 28
        %s678 = sld [smem:[#allocation2 + %s677]]
        %v679 = vstv %s678
        %v680 = vmul.f32 %v679, %v673
        %v681 = vmul.f32 %v679, %v675
        %v682 = vadd.f32 %v670, %v680
        %v683 = vadd.f32 %v671, %v681
        %s684 = sadd.s32 %s176, 34
        %s685 = sld [smem:[#allocation2 + %s684]]
        %v686 = vstv %s685
        %v687 = vmul.f32 %v686, %v673
        %v688 = vmul.f32 %v686, %v674
        %v689 = vmul.f32 %v686, %v675
        %v690 = vmul.f32 %v686, %v676
        %v695 = vrot.slane %v687, 1
        %v696 = vrot.slane %v688, 1
        %v697 = vsel %vm213, %v695, %v696
        %v698 = vrot.slane %v689, 1
        %v699 = vrot.slane %v690, 1
        %v700 = vsel %vm213, %v698, %v699
        %v703 = vadd.f32 %v682, %v697
        %v704 = vadd.f32 %v683, %v700
        %s705 = scalar_lea.vmem %s0, 352
        %v706 = vld [vmem:[%s705] sm:$0xff]
        %v707 = vld [vmem:[%s705 + $0x10] sm:$0xff]
        %s708 = sadd.s32 %s176, 30
        %s709 = sld [smem:[#allocation2 + %s708]]
        %v710 = vstv %s709
        %v711 = vmul.f32 %v710, %v706
        %v712 = vmul.f32 %v710, %v707
        %v713 = vadd.f32 %v703, %v711
        %v714 = vadd.f32 %v704, %v712
        %s715 = sadd.s32 %s176, 32
        %s716 = sld [smem:[#allocation2 + %s715]]
        %v717 = vstv %s716
        %v718 = vmul.f32 %v717, %v706
        %v719 = vmul.f32 %v717, %v707
        %722 = vrot.lane.b32.xlu0 %v718, 127
        %v723 = vpop.permute.xlu0 %722
        %724 = vrot.lane.b32.xlu0 %v719, 127
        %v725 = vpop.permute.xlu0 %724
        %v728 = vadd.f32 %v713, %v723
        %v729 = vadd.f32 %v714, %v725
        %s730 = scalar_lea.vmem %s0, 480
        %v731 = vld [vmem:[%s730] sm:$0xff]
        %v732 = vld [vmem:[%s730 + $0x10] sm:$0xff]
        %s733 = sadd.s32 %s176, 31
        %s734 = sld [smem:[#allocation2 + %s733]]
        %v735 = vstv %s734
        %v736 = vmul.f32 %v735, %v731
        %v737 = vmul.f32 %v735, %v732
        %v738 = vadd.f32 %v728, %v736
        %v739 = vadd.f32 %v729, %v737
        %s740 = sld [smem:[#allocation5 + %s19]]
        %v741 = vstv %s740
        %v742 = vadd.f32 %v738, %v741
        %v743 = vadd.f32 %v739, %v741
        %vm744 = vcmp.ge.f32.partialorder %v742, 0.0
        %vm745 = vcmp.ge.f32.partialorder %v743, 0.0
        %v746 = vmul.f32 %v742, 0.2
        %v747 = vmul.f32 %v743, 0.2
        %v748 = vsel %vm744, %v742, %v746
        %v749 = vsel %vm745, %v743, %v747
        %vm750 = vcmask 64512
        %751 = vst.msk [vmem:[%s175] sm:$0xff] %vm750, %v748
        %752 = vst.msk [vmem:[%s175 + $0x8] sm:$0xff] %vm750, %v749
        %s753 = sand.u32 %s90, 1
        %s754 = scalar_lea.sflag [#allocation3], %s753
        %s755 = sand.u32 %s90, 1
        %s756 = smul.addr %s755, 16
        %s757 = scalar_lea.vmem [#allocation7], %s756
        // Predicated region
        $region41: #{tpu_custom_call.1} parent=31 // pred_check
          %p758 = pneg %p100
        $region42: #{tpu_custom_call.1} parent=31 // pred_check_branch
          %760 = sbr.rel (%p758) target = $region44
        $region43: #{tpu_custom_call.1} parent=31 // pred_region
          %s762 = ssub.s32 256, 256
          %763 = vsyncadd %s754, %s762
          %s764 = smul.addr %s19, 128
          %s765 = scalar_lea.hbm %s3, %s764
          %s766 = sshll.u32 %s757, 4
          %s767 = int_to_ptr.vmem [resolvable:$true] %s766
          %772 = dma.vmem_to_hbm [thread:$0]  %s767, 256, %s765, %s754, 128, 1024, 8
        $region44: #{tpu_custom_call.1} parent=31 // pred_fallthru
          _
      $region32: #{tpu_custom_call.1} parent=5 // pred_fallthru
        _
      %p773 = scmp.le.s32.totalorder 2, %s14
      // Predicated region
      $region45: #{tpu_custom_call.1} parent=5 // pred_check
        %p774 = pneg %p773
      $region46: #{tpu_custom_call.1} parent=5 // pred_check_branch
        %776 = sbr.rel (%p774) target = $region48
      $region47: #{tpu_custom_call.1} parent=5 // pred_region
        %s777 = ssub.s32 %s14, 2
        // Predicated region
        $region49: #{tpu_custom_call.1} parent=47 // pred_check
          %p778 = pneg %p106
        $region50: #{tpu_custom_call.1} parent=47 // pred_check_branch
          %780 = sbr.rel (%p778) target = $region52
        $region51: #{tpu_custom_call.1} parent=47 // pred_region
          %s781 = sand.u32 %s91, 1
          %s782 = scalar_lea.sflag [#allocation3], %s781
          %s783 = sand.u32 %s91, 1
          %s784 = smul.addr %s783, 16
          %s785 = scalar_lea.vmem [#allocation7], %s784
          %786 = dma.done %s782, 256
        $region52: #{tpu_custom_call.1} parent=47 // pred_fallthru
          _
      $region48: #{tpu_custom_call.1} parent=5 // pred_fallthru
        _
    $region6: #{tpu_custom_call.1} parent=1 // loop_footer
      %s18 = sadd.s32 1, %s14
    $region7: #{tpu_custom_call.1} parent=1 // loop_footer_branch
      %13 = sbr.rel target = $region3
    $region8: #{tpu_custom_call.1} parent=1 // loop_exit
      _
    %787 = vsyncpa [#allocation3], 1
    %s788 = scalar_lea.sflag [#allocation3], 1
    %789 = vsyncpa %s788, 1
    %790 = vsyncpa [#allocation4], 1
    %s791 = scalar_lea.sflag [#allocation4], 1
    %792 = vsyncpa %s791, 1
    %793 = vsyncpa [#allocation6], 1

</llo_original>
